<compile_context>
chip_gen: v5e
topology: v5e:2x2
jax: 0.10.0
libtpu: 0.0.40
codegen_flags: <defaults>
</compile_context>

<pallas_src>
import math

import jax
import jax.numpy as jnp
import numpy as np
from jax import lax
from jax.experimental import pallas as pl
from jax.experimental.pallas import tpu as pltpu


def _choose_row_tile(seq_len: int, embed_dim: int) -> int:
    """Rows (tokens) per output block: multiple of 8, ~2 MiB f32 output block.

    2 MiB * 2 (double buffering) stays comfortably inside every generation's
    scoped VMEM (v5e 16 MiB default, v6e 32 MiB, v7x 64 MiB physical).
    """
    target_bytes = 2 * 1024 * 1024
    rows = target_bytes // max(embed_dim * 4, 1)
    rows = max(8, min(2048, rows))
    rows -= rows % 8
    if seq_len <= rows:
        return seq_len  # a full-extent block is always a legal block shape
    return rows


def _freq_phase(embed_dim: int):
    """Per-output-column angular frequency and phase (host-side constants).

    Columns [0, half)        -> sin(pos * f[j])            : phase 0
    Columns [half, 2*half)   -> cos(pos * f[j]) = sin(+pi/2): phase pi/2
    Odd tail column (if any) -> 0                           : freq 0, phase 0
    """
    half = embed_dim // 2
    # Same formula as the reference module (divides by half-1; embed_dim in
    # {2, 3} produces inf/nan exactly like the PyTorch module does).
    scale = math.log(10000.0) / (half - 1)
    freqs = np.exp(np.arange(half, dtype=np.float64) * -scale)
    freq = np.zeros((embed_dim,), dtype=np.float32)
    phase = np.zeros((embed_dim,), dtype=np.float32)
    freq[:half] = freqs
    freq[half:2 * half] = freqs
    phase[half:2 * half] = np.float32(math.pi / 2.0)
    return freq.reshape(1, 1, embed_dim), phase.reshape(1, 1, embed_dim)


def _make_kernel(padding_idx: int, row_tile: int):
    def kernel(x_ref, freq_ref, phase_ref, o_ref):
        # x_ref:     (1, TS, 1) int32  token ids (tokens along the sublane axis)
        # freq_ref:  (1, 1, E)  f32    per-column angular frequency
        # phase_ref: (1, 1, E)  f32    0 for sin half, pi/2 for cos half
        # o_ref:     (1, TS, E)        output block
        x = x_ref[...]
        mask = x != padding_idx                                   # (1, TS, 1)

        # Global position = tile_base + local row + padding_idx + 1.
        base = pl.program_id(1) * row_tile + padding_idx + 1
        pos = lax.broadcasted_iota(jnp.int32, x.shape, 1) + base  # (1, TS, 1)
        # NOTE: float32 cast is exact for positions < 2**24 (any realistic seq).
        # Pad tokens get the range position too; their whole row is zeroed below,
        # exactly like weights[padding_idx, :] == 0 in the reference.
        pos_f = pos.astype(jnp.float32)

        # cos(x) == sin(x + pi/2): a single EUP transcendental per element.
        ang = pos_f * freq_ref[...] + phase_ref[...]              # (1, TS, E)
        emb = jnp.sin(ang)
        emb = jnp.where(mask, emb, 0.0)
        o_ref[...] = emb.astype(o_ref.dtype)

    return kernel


def sinusoidal_positional_embedding(
    x: jax.Array,
    embed_dim: int,
    padding_idx: int,
    *,
    row_tile: int | None = None,
    out_dtype=jnp.float32,
):
    """x: (bsz, seq_len) int token ids -> (bsz, seq_len, embed_dim) out_dtype."""
    bsz, seq_len = x.shape
    ts = _choose_row_tile(seq_len, embed_dim) if row_tile is None else row_tile
    n_row_tiles = pl.cdiv(seq_len, ts)

    freq_np, phase_np = _freq_phase(embed_dim)
    freq = jnp.asarray(freq_np)
    phase = jnp.asarray(phase_np)
    # Trailing singleton dim puts tokens on the sublane axis inside the kernel.
    x3 = x.astype(jnp.int32)[..., None]  # (bsz, seq_len, 1)

    kernel = _make_kernel(padding_idx, ts)
    return pl.pallas_call(
        kernel,
        out_shape=jax.ShapeDtypeStruct((bsz, seq_len, embed_dim), out_dtype),
        grid=(bsz, n_row_tiles),
        in_specs=[
            pl.BlockSpec((1, ts, 1), lambda b, s: (b, s, 0)),
            pl.BlockSpec((1, 1, embed_dim), lambda b, s: (0, 0, 0)),
            pl.BlockSpec((1, 1, embed_dim), lambda b, s: (0, 0, 0)),
        ],
        out_specs=pl.BlockSpec((1, ts, embed_dim), lambda b, s: (b, s, 0)),
        compiler_params=pltpu.CompilerParams(
            dimension_semantics=("parallel", "parallel"),
        ),
    )(x3, freq, phase)


def _reference_forward(x_np: np.ndarray, embed_dim: int, padding_idx: int):
    """Pure-numpy replica of the PyTorch module's forward (table build + gather)."""
    bsz, seq_len = x_np.shape
    max_pos = padding_idx + 1 + seq_len
    half = embed_dim // 2
    scale = math.log(10000.0) / (half - 1)
    freqs = np.exp(np.arange(half, dtype=np.float64) * -scale)
    ang = np.arange(max_pos, dtype=np.float64)[:, None] * freqs[None, :]
    table = np.concatenate([np.sin(ang), np.cos(ang)], axis=1)
    if embed_dim % 2 == 1:
        table = np.concatenate([table, np.zeros((max_pos, 1))], axis=1)
    table[padding_idx, :] = 0.0

    mask = (x_np != padding_idx).astype(np.int64)
    rng = np.arange(seq_len)[None, :] + padding_idx + 1
    positions = rng * mask + padding_idx * (1 - mask)
    out = table[positions.reshape(-1)].reshape(bsz, seq_len, -1)
    return out.astype(np.float32)


if __name__ == "__main__":
    padding_idx = 1
    key = jax.random.PRNGKey(0)
    k1, k2 = jax.random.split(key)

    # Test 1: small shapes matching the module's expected input (single tile).
    embed_dim, bsz, seq_len = 32, 2, 8
    x = jax.random.randint(k1, (bsz, seq_len), 2, 100, dtype=jnp.int32)
    x = x.at[0, -2:].set(padding_idx)
    x = x.at[1, -1].set(padding_idx)
    out = jax.block_until_ready(
        sinusoidal_positional_embedding(x, embed_dim, padding_idx)
    )
    ref = _reference_forward(np.asarray(x), embed_dim, padding_idx)
    np.testing.assert_allclose(np.asarray(out), ref, rtol=1e-5, atol=1e-5)

    # Test 2: exercise the tiled multi-grid-step path (grid = (2, 4)).
    # Slightly looser atol: the sin(x + pi/2) rewrite's f32 rounding of the
    # phase grows with |position| (still ~1e-6-level here).
    bsz2, seq_len2 = 2, 64
    x2 = jax.random.randint(k2, (bsz2, seq_len2), 2, 100, dtype=jnp.int32)
    x2 = x2.at[0, 5].set(padding_idx)
    x2 = x2.at[1, -3:].set(padding_idx)
    out2 = jax.block_until_ready(
        sinusoidal_positional_embedding(x2, embed_dim, padding_idx, row_tile=16)
    )
    ref2 = _reference_forward(np.asarray(x2), embed_dim, padding_idx)
    np.testing.assert_allclose(np.asarray(out2), ref2, rtol=1e-5, atol=3e-5)

    print("KERNEL_OK")
</pallas_src>

<mosaic_0001>
module attributes {stable_mosaic.version = 11 : i64} {
  func.func @kernel(%arg0: i32, %arg1: i32, %arg2: memref<1x8x1xi32, #tpu.memory_space<vmem>>, %arg3: memref<1x1x32xf32, #tpu.memory_space<vmem>>, %arg4: memref<1x1x32xf32, #tpu.memory_space<vmem>>, %arg5: memref<1x8x32xf32, #tpu.memory_space<vmem>>) attributes {dimension_semantics = [#tpu.dimension_semantics<parallel>, #tpu.dimension_semantics<parallel>], iteration_bounds = array<i64: 2, 1>, scalar_prefetch = 0 : i64, scratch_operands = 0 : i64, tpu.core_type = #tpu.core_type<tc>, window_params = [{transform_indices = @transform_0, window_bounds = array<i64: 1, 8, 1>}, {pipeline_mode = #tpu.pipeline_mode<synchronous>, transform_indices = @transform_1, window_bounds = array<i64: 1, 1, 32>}, {pipeline_mode = #tpu.pipeline_mode<synchronous>, transform_indices = @transform_2, window_bounds = array<i64: 1, 1, 32>}, {transform_indices = @transform_3, window_bounds = array<i64: 1, 8, 32>}]} {
    %c0 = arith.constant 0 : index
    %c0_0 = arith.constant 0 : index
    %c0_1 = arith.constant 0 : index
    %0 = vector.load %arg2[%c0, %c0_0, %c0_1] : memref<1x8x1xi32, #tpu.memory_space<vmem>>, vector<1x8x1xi32>
    %c1_i32 = arith.constant 1 : i32
    %1 = vector.broadcast %c1_i32 : i32 to vector<1x8x1xi32>
    %2 = arith.cmpi ne, %0, %1 : vector<1x8x1xi32>
    %c8_i32 = arith.constant 8 : i32
    %3 = arith.muli %arg1, %c8_i32 : i32
    %c1_i32_2 = arith.constant 1 : i32
    %4 = arith.addi %3, %c1_i32_2 : i32
    %c1_i32_3 = arith.constant 1 : i32
    %5 = arith.addi %4, %c1_i32_3 : i32
    %6 = tpu.iota {dimensions = array<i32: 1>} : vector<1x8x1xi32>
    %7 = vector.broadcast %5 : i32 to vector<1x8x1xi32>
    %8 = arith.addi %6, %7 : vector<1x8x1xi32>
    %9 = arith.sitofp %8 : vector<1x8x1xi32> to vector<1x8x1xf32>
    %c0_4 = arith.constant 0 : index
    %c0_5 = arith.constant 0 : index
    %c0_6 = arith.constant 0 : index
    %10 = vector.load %arg3[%c0_4, %c0_5, %c0_6] : memref<1x1x32xf32, #tpu.memory_space<vmem>>, vector<1x1x32xf32>
    %11 = vector.broadcast %9 : vector<1x8x1xf32> to vector<1x8x32xf32>
    %12 = vector.broadcast %10 : vector<1x1x32xf32> to vector<1x8x32xf32>
    %13 = arith.mulf %11, %12 : vector<1x8x32xf32>
    %c0_7 = arith.constant 0 : index
    %c0_8 = arith.constant 0 : index
    %c0_9 = arith.constant 0 : index
    %14 = vector.load %arg4[%c0_7, %c0_8, %c0_9] : memref<1x1x32xf32, #tpu.memory_space<vmem>>, vector<1x1x32xf32>
    %15 = vector.broadcast %14 : vector<1x1x32xf32> to vector<1x8x32xf32>
    %16 = arith.addf %13, %15 : vector<1x8x32xf32>
    %17 = math.sin %16 : vector<1x8x32xf32>
    %cst = arith.constant 0.000000e+00 : f32
    %18 = vector.shape_cast %2 : vector<1x8x1xi1> to vector<1x8x1xi1>
    %19 = vector.broadcast %18 : vector<1x8x1xi1> to vector<1x8x32xi1>
    %20 = vector.broadcast %cst : f32 to vector<1x8x32xf32>
    %21 = arith.select %19, %17, %20 : vector<1x8x32xi1>, vector<1x8x32xf32>
    %c0_10 = arith.constant 0 : index
    %c0_11 = arith.constant 0 : index
    %c0_12 = arith.constant 0 : index
    %22 = vector.load %arg5[%c0_10, %c0_11, %c0_12] : memref<1x8x32xf32, #tpu.memory_space<vmem>>, vector<1x8x32xf32>
    tpu.vector_store %arg5[%c0_10, %c0_11, %c0_12], %21 {strides = array<i32>} : memref<1x8x32xf32, #tpu.memory_space<vmem>>, vector<1x8x32xf32>,
    return
  }
  func.func @transform_0(%arg0: i32, %arg1: i32) -> (i32, i32, i32) {
    %c0_i32 = arith.constant 0 : i32
    %c0_i32_0 = arith.constant 0 : i32
    return %arg0, %arg1, %c0_i32 : i32, i32, i32
  }
  func.func @transform_1(%arg0: i32, %arg1: i32) -> (i32, i32, i32) {
    %c0_i32 = arith.constant 0 : i32
    %c0_i32_0 = arith.constant 0 : i32
    %c0_i32_1 = arith.constant 0 : i32
    %c0_i32_2 = arith.constant 0 : i32
    return %c0_i32, %c0_i32_0, %c0_i32_1 : i32, i32, i32
  }
  func.func @transform_2(%arg0: i32, %arg1: i32) -> (i32, i32, i32) {
    %c0_i32 = arith.constant 0 : i32
    %c0_i32_0 = arith.constant 0 : i32
    %c0_i32_1 = arith.constant 0 : i32
    %c0_i32_2 = arith.constant 0 : i32
    return %c0_i32, %c0_i32_0, %c0_i32_1 : i32, i32, i32
  }
  func.func @transform_3(%arg0: i32, %arg1: i32) -> (i32, i32, i32) {
    %c0_i32 = arith.constant 0 : i32
    %c0_i32_0 = arith.constant 0 : i32
    return %arg0, %arg1, %c0_i32 : i32, i32, i32
  }
}

</mosaic_0001>

<llo_original>
// kernel: tpu_custom_call.1
$region0: #{tpu_custom_call.1}
  #allocation0 [shape = 'u32[]', space=smem, size = 0x4, offset = 0x4, fixed_abs, tag = 'smem constant byte address 0x4 - core index']
  #allocation1 [shape = 'u32[72,128]{1,0:T(1,128)}', space=vmem, size = 0x9000, scoped, tag = 'internal scratch']
  %s0 = inlined_call_operand.vmem [shape: s32[2,8,1], index: 0, kind: input, shape index: {}]
  %s1 = inlined_call_operand.vmem [shape: f32[1,1,32], index: 1, kind: input, shape index: {}]
  %s2 = inlined_call_operand.vmem [shape: f32[1,1,32], index: 2, kind: input, shape index: {}]
  %s3 = inlined_call_operand.hbm [shape: f32[2,8,32], index: 3, kind: output, shape index: {}]
  %s4 = sld [smem:[#allocation0]]
  $region45: #{tpu_custom_call.1} parent=0
    _
  %s6 = ssub.s32 1, %s4
  %s7 = scalar_select 0, %s6, %s4
  $region1: #{tpu_custom_call.1} parent=0
    #allocation2 [shape = 'u8[8192]{0}', space=vmem, size = 0x2000, scoped, tag = 'output window, operand 0']
    #allocation3 [shape = 's32[2]{0}', space=sflag, size = 0x8, scoped, tag = 'scoped memory for tpu_custom_call.1']
    %8 = vsyncpa [#allocation3], 0
    %s9 = scalar_lea.sflag [#allocation3], 1
    %10 = vsyncpa %s9, 0
    loop: start=0, step=1, limit=4
    $region2: #{tpu_custom_call.1} parent=1 // loop_pre_header
      _
    $region3: #{tpu_custom_call.1} parent=1 // loop_header
      %s12 = sphi 0, %s16
      %p13 = scmp.ge.s32.totalorder %s12, 4
      %s19 = sphi 0, %s31
      %s20 = sphi 0, %s27
      %s21 = sphi 0, %s19
      %s22 = sphi 0, %s20
      %s23 = sphi 0, %s21
      %s24 = sphi 0, %s22
      %s36 = sphi 0, %s38
      %s39 = sphi 0, %s36
      %s40 = sphi 0, %s39
      %s56 = sphi 0, %s40
      %s60 = sphi 0, %s60
      %s62 = sphi 0, %s60
      %s63 = sphi 0, %s62
      %s77 = sphi 0, %s63
      %s81 = sphi 0, %s81
      %s83 = sphi 0, %s81
      %s84 = sphi 0, %s83
      %s98 = sphi 0, %s84
      %s106 = sphi 0, %s108
      %s109 = sphi 0, %s106
      %s110 = sphi 0, %s109
      %s126 = sphi 0, %s110
    $region4: #{tpu_custom_call.1} parent=1 // loop_header_branch
      %15 = sbr.rel (%p13) target = $region8
    $region5: #{tpu_custom_call.1} parent=1 // loop_body
      %s17 = ssub.s32 %s12, 1
      %s18 = ssub.s32 %s12, 2
      %s25 = sadd.s32 1, %s20
      %p26 = scmp.ge.s32.totalorder %s25, 1
      %s27 = scalar_select %p26, 0, %s25
      %s28 = sadd.s32 1, %s19
      %s29 = scalar_select %p26, %s28, %s19
      %p30 = scmp.ge.s32.totalorder %s29, 2
      %s31 = scalar_select %p30, 0, %s29
      %s32 = ssub.s32 %s19, %s31
      %s33 = ssub.s32 %s20, %s27
      %s34 = sor.u32 %s32, %s33
      %p35 = scmp.eq.s32.totalorder %s34, 0
      %s37 = sadd.s32 %s36, 1
      %s38 = scalar_select %p35, %s36, %s37
      %p41 = pneg %p35
      %p42 = scmp.eq.s32.totalorder %s12, 1
      %p43 = por %p41, %p42
      %p44 = scmp.ne.s32.totalorder %s36, %s39
      %p45 = scmp.eq.s32.totalorder %s12, 0
      %p46 = por %p44, %p45
      %p47 = scmp.ne.s32.totalorder %s36, %s39
      %p48 = scmp.eq.s32.totalorder %s17, 1
      %p49 = por %p47, %p48
      %p50 = scmp.ne.s32.totalorder %s39, %s40
      %p51 = scmp.eq.s32.totalorder %s17, 0
      %p52 = por %p50, %p51
      %p53 = scmp.ne.s32.totalorder %s39, %s40
      %p54 = scmp.eq.s32.totalorder %s18, 1
      %p55 = por %p53, %p54
      %p57 = scmp.ne.s32.totalorder %s40, %s56
      %p58 = scmp.eq.s32.totalorder %s18, 0
      %p59 = por %p57, %p58
      %s61 = sadd.s32 %s60, 1
      %p64 = scmp.eq.s32.totalorder %s12, 1
      %p65 = scmp.ne.s32.totalorder %s60, %s62
      %p66 = scmp.eq.s32.totalorder %s12, 0
      %p67 = por %p65, %p66
      %p68 = scmp.ne.s32.totalorder %s60, %s62
      %p69 = scmp.eq.s32.totalorder %s17, 1
      %p70 = por %p68, %p69
      %p71 = scmp.ne.s32.totalorder %s62, %s63
      %p72 = scmp.eq.s32.totalorder %s17, 0
      %p73 = por %p71, %p72
      %p74 = scmp.ne.s32.totalorder %s62, %s63
      %p75 = scmp.eq.s32.totalorder %s18, 1
      %p76 = por %p74, %p75
      %p78 = scmp.ne.s32.totalorder %s63, %s77
      %p79 = scmp.eq.s32.totalorder %s18, 0
      %p80 = por %p78, %p79
      %s82 = sadd.s32 %s81, 1
      %p85 = scmp.eq.s32.totalorder %s12, 1
      %p86 = scmp.ne.s32.totalorder %s81, %s83
      %p87 = scmp.eq.s32.totalorder %s12, 0
      %p88 = por %p86, %p87
      %p89 = scmp.ne.s32.totalorder %s81, %s83
      %p90 = scmp.eq.s32.totalorder %s17, 1
      %p91 = por %p89, %p90
      %p92 = scmp.ne.s32.totalorder %s83, %s84
      %p93 = scmp.eq.s32.totalorder %s17, 0
      %p94 = por %p92, %p93
      %p95 = scmp.ne.s32.totalorder %s83, %s84
      %p96 = scmp.eq.s32.totalorder %s18, 1
      %p97 = por %p95, %p96
      %p99 = scmp.ne.s32.totalorder %s84, %s98
      %p100 = scmp.eq.s32.totalorder %s18, 0
      %p101 = por %p99, %p100
      %s102 = ssub.s32 %s19, %s31
      %s103 = ssub.s32 %s20, %s27
      %s104 = sor.u32 %s102, %s103
      %p105 = scmp.eq.s32.totalorder %s104, 0
      %s107 = sadd.s32 %s106, 1
      %s108 = scalar_select %p105, %s106, %s107
      %p111 = pneg %p105
      %p112 = scmp.eq.s32.totalorder %s12, 1
      %p113 = por %p111, %p112
      %p114 = scmp.ne.s32.totalorder %s106, %s109
      %p115 = scmp.eq.s32.totalorder %s12, 0
      %p116 = por %p114, %p115
      %p117 = scmp.ne.s32.totalorder %s106, %s109
      %p118 = scmp.eq.s32.totalorder %s17, 1
      %p119 = por %p117, %p118
      %p120 = scmp.ne.s32.totalorder %s109, %s110
      %p121 = scmp.eq.s32.totalorder %s17, 0
      %p122 = por %p120, %p121
      %p123 = scmp.ne.s32.totalorder %s109, %s110
      %p124 = scmp.eq.s32.totalorder %s18, 1
      %p125 = por %p123, %p124
      %p127 = scmp.ne.s32.totalorder %s110, %s126
      %p128 = scmp.eq.s32.totalorder %s18, 0
      %p129 = por %p127, %p128
      %p130 = scmp.le.s32.totalorder 1, %s12
      %p131 = scmp.lt.s32.totalorder %s12, 3
      %p132 = pnand %p130, %p131
      %p133 = pneg %p132
      // Predicated region
      $region9: #{tpu_custom_call.1} parent=5 // pred_check
        _
      $region10: #{tpu_custom_call.1} parent=5 // pred_check_branch
        %135 = sbr.rel (%p132) target = $region12
      $region11: #{tpu_custom_call.1} parent=5 // pred_region
        %s136 = ssub.s32 %s12, 1
        // Predicated region
        $region13: #{tpu_custom_call.1} parent=11 // pred_check
          %p137 = pneg %p73
        $region14: #{tpu_custom_call.1} parent=11 // pred_check_branch
          %139 = sbr.rel (%p137) target = $region16
        $region15: #{tpu_custom_call.1} parent=11 // pred_region
          _
        $region16: #{tpu_custom_call.1} parent=11 // pred_fallthru
          _
        // Predicated region
        $region17: #{tpu_custom_call.1} parent=11 // pred_check
          %p140 = pneg %p94
        $region18: #{tpu_custom_call.1} parent=11 // pred_check_branch
          %142 = sbr.rel (%p140) target = $region20
        $region19: #{tpu_custom_call.1} parent=11 // pred_region
          _
        $region20: #{tpu_custom_call.1} parent=11 // pred_fallthru
          _
      $region12: #{tpu_custom_call.1} parent=5 // pred_fallthru
        _
      %p143 = scmp.lt.s32.totalorder %s12, 2
      // Predicated region
      $region21: #{tpu_custom_call.1} parent=5 // pred_check
        %p144 = pneg %p143
      $region22: #{tpu_custom_call.1} parent=5 // pred_check_branch
        %146 = sbr.rel (%p144) target = $region24
      $region23: #{tpu_custom_call.1} parent=5 // pred_region
        // Predicated region
        $region25: #{tpu_custom_call.1} parent=23 // pred_check
          %p147 = pneg %p46
        $region26: #{tpu_custom_call.1} parent=23 // pred_check_branch
          %149 = sbr.rel (%p147) target = $region28
        $region27: #{tpu_custom_call.1} parent=23 // pred_region
          %p150 = scmp.lt.s32.totalorder %s19, 1
          %s151 = scalar_select %p150, %s19, 1
          %p152 = scmp.lt.s32.totalorder %s20, 0
          %s153 = scalar_select %p152, %s20, 0
          %s154 = sadd.s32 %s153, %s151
          %s155 = smul.addr %s154, 8
          %s156 = scalar_lea.vmem %s0, %s155
        $region28: #{tpu_custom_call.1} parent=23 // pred_fallthru
          _
      $region24: #{tpu_custom_call.1} parent=5 // pred_fallthru
        _
      %p157 = scmp.le.s32.totalorder 1, %s12
      %p158 = scmp.lt.s32.totalorder %s12, 3
      %p159 = pnand %p157, %p158
      %p160 = pneg %p159
      // Predicated region
      $region29: #{tpu_custom_call.1} parent=5 // pred_check
        _
      $region30: #{tpu_custom_call.1} parent=5 // pred_check_branch
        %162 = sbr.rel (%p159) target = $region32
      $region31: #{tpu_custom_call.1} parent=5 // pred_region
        %s163 = ssub.s32 %s12, 1
        %p164 = scmp.lt.s32.totalorder %s21, 1
        %s165 = scalar_select %p164, %s21, 1
        %p166 = scmp.lt.s32.totalorder %s22, 0
        %s167 = scalar_select %p166, %s22, 0
        %s168 = sadd.s32 %s167, %s165
        %s169 = smul.addr %s168, 8
        %s170 = scalar_lea.vmem %s0, %s169
        %p171 = pneg %p52
        %p172 = pneg %p49
        %p173 = pneg %p73
        %p174 = pneg %p70
        %p175 = pneg %p94
        %p176 = pneg %p91
        %p177 = pneg %p122
        %p178 = pneg %p119
        %s179 = sand.u32 %s109, 1
        %s180 = scalar_lea.sflag [#allocation3], %s179
        %s181 = sand.u32 %s109, 1
        %s182 = smul.addr %s181, 8
        %s183 = scalar_lea.vmem [#allocation2], %s182
        %p184 = scmp.lt.s32.totalorder %s21, 1
        %s185 = scalar_select %p184, %s21, 1
        %p186 = scmp.lt.s32.totalorder %s22, 0
        %s187 = scalar_select %p186, %s22, 0
        %s188 = sadd.s32 %s187, %s185
        %s189 = smul.addr %s188, 8
        %s190 = scalar_lea.vmem %s0, %s189
        %v191 = vld [vmem:[%s190] sm:$0xff]
        %vm192 = vcmp.ne.s32.totalorder %v191, 1
        %s193 = smul.u32 %s22, 8
        %s194 = sadd.s32 %s193, 2
        %v195 = vlaneseq
        %v196 = vshrl.u32 %v195, 7
        %v197 = vstv %s194
        %v198 = vadd.s32 %v196, %v197
        %v199 = vcvt.s32.f32 %v198
        %v200 = vld [vmem:[%s1] sm:$0x1]
        %v202 = vperm.slane %v200, 0
        %v204 = vmul.f32 %v199, %v202
        %v205 = vld [vmem:[%s2] sm:$0x1]
        %v207 = vperm.slane %v205, 0
        %v209 = vadd.f32 %v204, %v207
        %v210 = vand.u32 2147483647, %v209
        %vm211 = vcmp.le.f32.partialorder %v210, 0.7853982
        %vm212 = vcmp.lt.s32.totalorder %v209, 0
        %v213 = vand.u32 %v209, 2139095040
        %v214 = vshrl.u32 %v213, 23
        %v215 = vsub.s32 %v214, 127
        %v216 = vand.u32 2147483647, %v209
        %v217 = vand.u32 %v216, 8388607
        %v218 = vor.u32 %v217, 8388608
        %v219 = vsub.s32 0, %v218
        %v220 = vadd.s32 %v215, 1
        %vm221 = vcmp.gt.s32.totalorder %v220, 0
        %v222 = vsel %vm221, %v220, 0
        %v223 = vshrl.u32 %v222, 5
        %v224 = vand.u32 %v222, 31
        %v225 = vsub.s32 32, %v224
        %v226 = vshrl.u32 683565275, %v225
        %v227 = vshll.u32 683565275, %v224
        %v228 = vshrl.u32 2475754826, %v225
        %v229 = vor.u32 %v227, %v228
        %v230 = vshll.u32 2475754826, %v224
        %v231 = vshrl.u32 2131351028, %v225
        %v232 = vor.u32 %v230, %v231
        %v233 = vshll.u32 2131351028, %v224
        %v234 = vshrl.u32 2102212464, %v225
        %v235 = vor.u32 %v233, %v234
        %v236 = vshll.u32 2102212464, %v224
        %v237 = vshrl.u32 920167782, %v225
        %v238 = vor.u32 %v236, %v237
        %v239 = vshll.u32 920167782, %v224
        %v240 = vshrl.u32 1326507024, %v225
        %v241 = vor.u32 %v239, %v240
        %vm242 = vcmp.lt.s32.totalorder %v223, 1
        %vm243 = vcmp.lt.s32.totalorder %v223, 2
        %vm244 = vcmp.lt.s32.totalorder %v223, 3
        %vm245 = vcmp.lt.s32.totalorder %v223, 4
        %v246 = vsel %vm242, %v226, %v229
        %v247 = vsel %vm245, %v235, 2102212464
        %v248 = vsel %vm244, %v232, %v247
        %v249 = vsel %vm243, %v246, %v248
        %v250 = vsel %vm242, %v229, %v232
        %v251 = vsel %vm245, %v238, 920167782
        %v252 = vsel %vm244, %v235, %v251
        %v253 = vsel %vm243, %v250, %v252
        %v254 = vsel %vm242, %v232, %v235
        %v255 = vsel %vm245, %v241, 1326507024
        %v256 = vsel %vm244, %v238, %v255
        %v257 = vsel %vm243, %v254, %v256
        %v258 = vshll.u32 %v218, 8
        %v259 = vand.u32 %v258, 65535
        %v260 = vshrl.u32 %v258, 16
        %v261 = vand.u32 %v257, 65535
        %v262 = vshrl.u32 %v257, 16
        %v263 = vmul.u32 %v259, %v261
        %v264 = vmul.u32 %v259, %v262
        %v265 = vmul.u32 %v260, %v261
        %v266 = vmul.u32 %v260, %v262
        %v267 = vshll.u32 %v264, 16
        %v268 = vshrl.u32 %v264, 16
        %v269 = vshll.u32 %v265, 16
        %v270 = vshrl.u32 %v265, 16
        %vm271 = vc.u32 %v263, %v267
        %v272 = vsel %vm271, 1, 0
        %v273 = vadd.s32 %v263, %v267
        %v274 = vadd.s32 %v266, %v272
        %vm275 = vc.u32 %v273, %v269
        %v276 = vsel %vm275, 1, 0
        %v277 = vadd.s32 %v273, %v269
        %v278 = vadd.s32 %v274, %v276
        %v279 = vadd.s32 %v278, %v268
        %v280 = vadd.s32 %v279, %v270
        %v281 = vand.u32 %v258, 65535
        %v282 = vshrl.u32 %v258, 16
        %v283 = vand.u32 %v253, 65535
        %v284 = vshrl.u32 %v253, 16
        %v285 = vmul.u32 %v281, %v283
        %v286 = vmul.u32 %v281, %v284
        %v287 = vmul.u32 %v282, %v283
        %v288 = vmul.u32 %v282, %v284
        %v289 = vshll.u32 %v286, 16
        %v290 = vshrl.u32 %v286, 16
        %v291 = vshll.u32 %v287, 16
        %v292 = vshrl.u32 %v287, 16
        %vm293 = vc.u32 %v285, %v289
        %v294 = vsel %vm293, 1, 0
        %v295 = vadd.s32 %v285, %v289
        %v296 = vadd.s32 %v288, %v294
        %vm297 = vc.u32 %v295, %v291
        %v298 = vsel %vm297, 1, 0
        %v299 = vadd.s32 %v295, %v291
        %v300 = vadd.s32 %v296, %v298
        %v301 = vadd.s32 %v300, %v290
        %v302 = vadd.s32 %v301, %v292
        %v303 = vmul.u32 %v258, %v249
        %v304 = vadd.s32 %v280, %v299
        %vm305 = vc.u32 %v280, %v299
        %v306 = vadd.s32 %v302, 1
        %v307 = vsel %vm305, %v306, %v302
        %v308 = vadd.s32 %v303, %v307
        %v309 = vadd.s32 %v308, 536870912
        %v310 = vshrl.u32 %v309, 30
        %v311 = vshll.u32 %v310, 30
        %v312 = vsub.s32 %v308, %v311
        %vm313 = vcmp.lt.s32.totalorder %v312, 0
        %v314 = vsub.s32 0, %v312
        %v315 = vsel %vm313, %v314, %v312
        %v316 = vclz %v315
        %v317 = vsub.s32 %v316, 2
        %vm318 = vcmp.gt.s32.totalorder 0, %v317
        %v319 = vsel %vm318, 0, %v317
        %v320 = vsub.s32 32, %v319
        %v321 = vshll.u32 %v312, %v319
        %v322 = vshrl.u32 %v304, %v320
        %v323 = vor.u32 %v321, %v322
        %v324 = vsub.s32 4294967266, %v319
        %v325 = vadd.s32 %v324, 127
        %v326 = vshll.u32 %v325, 23
        %v327 = vor.u32 4788187, %v326
        %v328 = vand.u32 2147483647, %v327
        %v330 = vcvt.s32.f32 %v323
        %v331 = vmul.f32 %v330, %v328
        %v332 = vxor.u32 %v331, 2147483648
        %v333 = vsel %vm212, %v332, %v331
        %v334 = vsub.s32 4, %v310
        %v335 = vsel %vm212, %v334, %v310
        %v336 = vsel %vm211, %v209, %v333
        %v337 = vsel %vm211, 0, %v335
        %v338 = vmul.f32 %v336, %v336
        %v339 = vmul.f32 %v338, -0.001358992
        %v340 = vadd.f32 %v339, 0.041655596
        %v341 = vmul.f32 %v338, %v340
        %v342 = vadd.f32 %v341, -0.4999988
        %v343 = vmul.f32 %v338, %v342
        %v344 = vadd.f32 1.0, %v343
        %v345 = vmul.f32 %v336, %v336
        %v346 = vmul.f32 %v345, -0.00019511016
        %v347 = vadd.f32 %v346, 0.008332121
        %v348 = vmul.f32 %v345, %v347
        %v349 = vadd.f32 %v348, -0.16666654
        %v350 = vmul.f32 %v345, %v349
        %v351 = vadd.f32 %v350, 1.0
        %v352 = vmul.f32 %v351, %v336
        %vm353 = vweird.f32 %v209
        %v354 = vadd.s32 %v337, 3
        %v355 = vand.u32 %v354, 3
        %vm356 = vcmp.lt.s32.totalorder %v355, 2
        %vm357 = vcmp.eq.s32.totalorder %v355, 0
        %v358 = vxor.u32 %v352, 2147483648
        %v359 = vsel %vm357, %v344, %v358
        %vm360 = vcmp.eq.s32.totalorder %v355, 2
        %v361 = vxor.u32 %v344, 2147483648
        %v362 = vsel %vm360, %v361, %v352
        %v363 = vsel %vm356, %v359, %v362
        %v364 = vsel %vm353, nan, %v363
        %v365 = vsel %vm192, 1, 0
        %366 = vset.pattern.permute.xlu0 0
        %367 = vperm.xlu0 %366, %v365
        %v368 = vpop.permute.xlu0 %367
        %vm369 = vcmp.eq.s32.totalorder %v368, 1
        %v370 = vsel %vm369, %v364, 0.0
        %vm371 = vcmask 261120
        %372 = vst.msk [vmem:[%s183] sm:$0xff] %vm371, %v370
        %s373 = sand.u32 %s109, 1
        %s374 = scalar_lea.sflag [#allocation3], %s373
        %s375 = sand.u32 %s109, 1
        %s376 = smul.addr %s375, 8
        %s377 = scalar_lea.vmem [#allocation2], %s376
        // Predicated region
        $region33: #{tpu_custom_call.1} parent=31 // pred_check
          %p378 = pneg %p119
        $region34: #{tpu_custom_call.1} parent=31 // pred_check_branch
          %380 = sbr.rel (%p378) target = $region36
        $region35: #{tpu_custom_call.1} parent=31 // pred_region
          %382 = vsyncadd %s374, 0
          %s383 = sadd.s32 %s22, %s21
          %s384 = smul.addr %s383, 8
          %s385 = scalar_lea.hbm %s3, %s384
          %s387 = sshll.u32 %s377, 4
          %s388 = int_to_ptr.vmem [resolvable:$true] %s387
          %s389 = sshll.u32 %s385, 4
          %s390 = int_to_ptr.hbm [resolvable:$true] %s389
          %392 = dma.vmem_to_hbm [thread:$0]  %s388, 128, %s390, %s374
        $region36: #{tpu_custom_call.1} parent=31 // pred_fallthru
          _
      $region32: #{tpu_custom_call.1} parent=5 // pred_fallthru
        _
      %p393 = scmp.le.s32.totalorder 2, %s12
      // Predicated region
      $region37: #{tpu_custom_call.1} parent=5 // pred_check
        %p394 = pneg %p393
      $region38: #{tpu_custom_call.1} parent=5 // pred_check_branch
        %396 = sbr.rel (%p394) target = $region40
      $region39: #{tpu_custom_call.1} parent=5 // pred_region
        %s397 = ssub.s32 %s12, 2
        // Predicated region
        $region41: #{tpu_custom_call.1} parent=39 // pred_check
          %p398 = pneg %p125
        $region42: #{tpu_custom_call.1} parent=39 // pred_check_branch
          %400 = sbr.rel (%p398) target = $region44
        $region43: #{tpu_custom_call.1} parent=39 // pred_region
          %s401 = sand.u32 %s110, 1
          %s402 = scalar_lea.sflag [#allocation3], %s401
          %s403 = sand.u32 %s110, 1
          %s404 = smul.addr %s403, 8
          %s405 = scalar_lea.vmem [#allocation2], %s404
          %407 = dma.done %s402, 128
        $region44: #{tpu_custom_call.1} parent=39 // pred_fallthru
          _
      $region40: #{tpu_custom_call.1} parent=5 // pred_fallthru
        _
    $region6: #{tpu_custom_call.1} parent=1 // loop_footer
      %s16 = sadd.s32 1, %s12
    $region7: #{tpu_custom_call.1} parent=1 // loop_footer_branch
      %11 = sbr.rel target = $region3
    $region8: #{tpu_custom_call.1} parent=1 // loop_exit
      _
    %408 = vsyncpa [#allocation3], 1
    %s409 = scalar_lea.sflag [#allocation3], 1
    %410 = vsyncpa %s409, 1

</llo_original>
